<compile_context>
chip_gen: v5e
topology: v5e:2x2
jax: 0.10.0
libtpu: 0.0.40
codegen_flags: <defaults>
</compile_context>

<pallas_src>
import functools

import jax
import jax.numpy as jnp
from jax.experimental import pallas as pl
from jax.experimental.pallas import tpu as pltpu

LEAKY_SLOPE = 0.01          # nn.LeakyReLU() default (reference module uses default)
IN_EPS = 1e-5               # nn.InstanceNorm2d default
ACT_DTYPE = jnp.bfloat16    # inter-layer activation dtype (halves HBM traffic)


def _round_up(x, m):
    return (x + m - 1) // m * m


def _pick_tile(dim, max_tile, quantum):
    """Balanced tile <= max_tile (multiple of `quantum`) minimizing zero padding."""
    n_tiles = -(-dim // max_tile)
    return _round_up(-(-dim // n_tiles), quantum)


def _apply_act(x, act):
    if act == "leaky":
        return jnp.where(x >= 0, x, LEAKY_SLOPE * x)
    if act == "relu":
        return jnp.maximum(x, 0.0)
    return x


# ---------------------------------------------------------------------------
# Pallas kernel 1: tiled bf16 matmul + fused bias (+ optional activation)
# ---------------------------------------------------------------------------
def _matmul_bias_act_1k_kernel(a_ref, b_ref, bias_ref, o_ref, *, act):
    # Single K step: no accumulator scratch, write straight to the output tile.
    y = jnp.dot(a_ref[...], b_ref[...],
                preferred_element_type=jnp.float32) + bias_ref[...]
    o_ref[...] = _apply_act(y, act).astype(o_ref.dtype)


def _matmul_bias_act_kernel(a_ref, b_ref, bias_ref, o_ref, acc_ref, *, act):
    k = pl.program_id(2)

    @pl.when(k == 0)
    def _():
        acc_ref[...] = jnp.zeros_like(acc_ref)

    acc_ref[...] += jnp.dot(a_ref[...], b_ref[...],
                            preferred_element_type=jnp.float32)

    @pl.when(k == pl.num_programs(2) - 1)
    def _():
        o_ref[...] = _apply_act(acc_ref[...] + bias_ref[...], act).astype(o_ref.dtype)


def matmul_bias(a, w, bias, out_dtype=ACT_DTYPE, act=None, tm=1024, tn=512, tk=512):
    """(M,K) @ (K,N) + bias[N] (+ fused activation). bf16 MXU, f32 accumulation."""
    M, K = a.shape
    _, N = w.shape
    tm = _pick_tile(M, tm, 16)
    tn = _pick_tile(N, tn, 128)
    if K <= tk:
        tk = _round_up(K, 64)            # thin-K layers (conv1 K=48): pad only to 64
    else:
        tk = _pick_tile(K, tk, 128)
    Mp, Kp, Np = _round_up(M, tm), _round_up(K, tk), _round_up(N, tn)

    a = a.astype(jnp.bfloat16)
    w = w.astype(jnp.bfloat16)
    if (Mp, Kp) != (M, K):
        a = jnp.pad(a, ((0, Mp - M), (0, Kp - K)))
    if (Kp, Np) != (K, N):
        w = jnp.pad(w, ((0, Kp - K), (0, Np - N)))
    b = bias.astype(jnp.float32)
    if Np != N:
        b = jnp.pad(b, (0, Np - N))
    b = b.reshape(1, Np)

    nk = Kp // tk
    if nk == 1:
        out = pl.pallas_call(
            functools.partial(_matmul_bias_act_1k_kernel, act=act),
            out_shape=jax.ShapeDtypeStruct((Mp, Np), out_dtype),
            grid_spec=pltpu.PrefetchScalarGridSpec(
                num_scalar_prefetch=0,
                grid=(Mp // tm, Np // tn),
                in_specs=[
                    pl.BlockSpec((tm, Kp), lambda i, j: (i, 0)),
                    pl.BlockSpec((Kp, tn), lambda i, j: (0, j)),
                    pl.BlockSpec((1, tn), lambda i, j: (0, j)),
                ],
                out_specs=pl.BlockSpec((tm, tn), lambda i, j: (i, j)),
            ),
            compiler_params=pltpu.CompilerParams(
                dimension_semantics=("parallel", "parallel")),
        )(a, w, b)
    else:
        out = pl.pallas_call(
            functools.partial(_matmul_bias_act_kernel, act=act),
            out_shape=jax.ShapeDtypeStruct((Mp, Np), out_dtype),
            grid_spec=pltpu.PrefetchScalarGridSpec(
                num_scalar_prefetch=0,
                grid=(Mp // tm, Np // tn, nk),
                in_specs=[
                    pl.BlockSpec((tm, tk), lambda i, j, k: (i, k)),
                    pl.BlockSpec((tk, tn), lambda i, j, k: (k, j)),
                    pl.BlockSpec((1, tn), lambda i, j, k: (0, j)),
                ],
                out_specs=pl.BlockSpec((tm, tn), lambda i, j, k: (i, j)),
                scratch_shapes=[pltpu.VMEM((tm, tn), jnp.float32)],
            ),
            compiler_params=pltpu.CompilerParams(
                dimension_semantics=("parallel", "parallel", "arbitrary")),
        )(a, w, b)
    if (Mp, Np) != (M, N):
        out = out[:M, :N]
    return out


# ---------------------------------------------------------------------------
# Pallas kernels 2: InstanceNorm2d (affine) + activation
#   small layers : single fused kernel (whole (HW, cblk) block resident)
#   large layers : HW-tiled two-pass (stats accumulation pass + normalize pass)
# ---------------------------------------------------------------------------
def _norm_act_fused_kernel(x_ref, gamma_ref, beta_ref, o_ref, *, act):
    x = x_ref[...].astype(jnp.float32)                   # (1, HW, cblk)
    hw = x.shape[1]
    inv_hw = 1.0 / hw
    mean = jnp.sum(x, axis=1, keepdims=True) * inv_hw
    ex2 = jnp.sum(x * x, axis=1, keepdims=True) * inv_hw
    var = jnp.maximum(ex2 - mean * mean, 0.0)            # one-pass, biased variance
    inv = jax.lax.rsqrt(var + IN_EPS)
    y = (x - mean) * (inv * gamma_ref[...]) + beta_ref[...]
    o_ref[...] = _apply_act(y, act).astype(o_ref.dtype)


def _in_stats_kernel(x_ref, s1_ref, s2_ref):
    @pl.when(pl.program_id(2) == 0)
    def _():
        s1_ref[...] = jnp.zeros_like(s1_ref)
        s2_ref[...] = jnp.zeros_like(s2_ref)

    x = x_ref[...].astype(jnp.float32)                   # (1, hwt, cblk)
    s1_ref[...] += jnp.sum(x, axis=1, keepdims=True)
    s2_ref[...] += jnp.sum(x * x, axis=1, keepdims=True)


def _scale_act_kernel(x_ref, sc_ref, sh_ref, o_ref, *, act):
    y = x_ref[...].astype(jnp.float32) * sc_ref[...] + sh_ref[...]
    o_ref[...] = _apply_act(y, act).astype(o_ref.dtype)


def norm_act(x, gamma, beta, act, out_dtype=ACT_DTYPE):
    """x: (N,H,W,C). InstanceNorm over (H,W) per (n,c) + activation, bf16 out."""
    N, H, W, C = x.shape
    HW = H * W
    # Lane-dense packing for C < 128 (C=64 -> 2 pixels per 128-lane row).
    pack = 1
    if C < 128 and 128 % C == 0 and HW % (128 // C) == 0:
        pack = 128 // C
    rows, Cp = HW // pack, C * pack
    xr = x.reshape(N, rows, Cp)
    cblk = 128 if Cp % 128 == 0 else Cp
    gamma_f = gamma.astype(jnp.float32)
    beta_f = beta.astype(jnp.float32)

    if rows <= 1024 and pack == 1:
        # Small layer: whole (HW, cblk) block (<= 512 KiB f32), single fused kernel.
        out = pl.pallas_call(
            functools.partial(_norm_act_fused_kernel, act=act),
            out_shape=jax.ShapeDtypeStruct((N, rows, Cp), out_dtype),
            grid=(N, Cp // cblk),
            in_specs=[
                pl.BlockSpec((1, rows, cblk), lambda n, c: (n, 0, c)),
                pl.BlockSpec((1, 1, cblk), lambda n, c: (0, 0, c)),
                pl.BlockSpec((1, 1, cblk), lambda n, c: (0, 0, c)),
            ],
            out_specs=pl.BlockSpec((1, rows, cblk), lambda n, c: (n, 0, c)),
            compiler_params=pltpu.CompilerParams(
                dimension_semantics=("parallel", "parallel")),
        )(xr, gamma_f.reshape(1, 1, Cp), beta_f.reshape(1, 1, Cp))
        return out.reshape(N, H, W, C)

    # Large layer: HW-tiled two-pass (bounded VMEM, pipelined DMAs, megacore grid).
    hwt = _pick_tile(rows, 1024, 16)
    rows_p = _round_up(rows, hwt)
    if rows_p != rows:
        xr = jnp.pad(xr, ((0, 0), (0, rows_p - rows), (0, 0)))
    grid = (N, Cp // cblk, rows_p // hwt)

    s1, s2 = pl.pallas_call(
        _in_stats_kernel,
        out_shape=(jax.ShapeDtypeStruct((N, 1, Cp), jnp.float32),
                   jax.ShapeDtypeStruct((N, 1, Cp), jnp.float32)),
        grid=grid,
        in_specs=[pl.BlockSpec((1, hwt, cblk), lambda n, c, h: (n, h, c))],
        out_specs=(pl.BlockSpec((1, 1, cblk), lambda n, c, h: (n, 0, c)),
                   pl.BlockSpec((1, 1, cblk), lambda n, c, h: (n, 0, c))),
        compiler_params=pltpu.CompilerParams(
            dimension_semantics=("parallel", "parallel", "arbitrary")),
    )(xr)

    # Tiny per-channel epilogue ((N,C) scalars): combine packed lane halves and
    # fold gamma/beta into a single scale/shift pair fed to the normalize pass.
    if pack > 1:
        s1 = jnp.tile(s1.reshape(N, 1, pack, C).sum(axis=2), (1, 1, pack))
        s2 = jnp.tile(s2.reshape(N, 1, pack, C).sum(axis=2), (1, 1, pack))
    mean = s1 * (1.0 / HW)
    var = jnp.maximum(s2 * (1.0 / HW) - mean * mean, 0.0)
    inv = jax.lax.rsqrt(var + IN_EPS)
    g = jnp.tile(gamma_f, pack).reshape(1, 1, Cp)
    bt = jnp.tile(beta_f, pack).reshape(1, 1, Cp)
    scale = inv * g                                      # (N,1,Cp) f32
    shift = bt - mean * scale

    out = pl.pallas_call(
        functools.partial(_scale_act_kernel, act=act),
        out_shape=jax.ShapeDtypeStruct((N, rows_p, Cp), out_dtype),
        grid=grid,
        in_specs=[
            pl.BlockSpec((1, hwt, cblk), lambda n, c, h: (n, h, c)),
            pl.BlockSpec((1, 1, cblk), lambda n, c, h: (n, 0, c)),
            pl.BlockSpec((1, 1, cblk), lambda n, c, h: (n, 0, c)),
        ],
        out_specs=pl.BlockSpec((1, hwt, cblk), lambda n, c, h: (n, h, c)),
        compiler_params=pltpu.CompilerParams(
            dimension_semantics=("parallel", "parallel", "parallel")),
    )(xr, scale, shift)
    if rows_p != rows:
        out = out[:, :rows, :]
    return out.reshape(N, H, W, C)


# ---------------------------------------------------------------------------
# Pallas kernel 3: lane-dense elementwise tanh (final C=3 layer)
# ---------------------------------------------------------------------------
def _tanh_kernel(x_ref, o_ref):
    o_ref[...] = jnp.tanh(x_ref[...].astype(jnp.float32)).astype(o_ref.dtype)


def tanh_lane_dense(x):
    """Elementwise tanh on a (rows,128) lane-dense view regardless of channel count."""
    shape = x.shape
    flat = x.reshape(-1)
    n = flat.shape[0]
    npad = _round_up(n, 16 * 128)
    if npad != n:
        flat = jnp.pad(flat, (0, npad - n))
    rows = npad // 128
    rtile = _pick_tile(rows, 512, 16)
    rows_p = _round_up(rows, rtile)
    x2 = flat.reshape(rows, 128)
    if rows_p != rows:
        x2 = jnp.pad(x2, ((0, rows_p - rows), (0, 0)))
    out = pl.pallas_call(
        _tanh_kernel,
        out_shape=jax.ShapeDtypeStruct((rows_p, 128), jnp.float32),
        grid=(rows_p // rtile,),
        in_specs=[pl.BlockSpec((rtile, 128), lambda i: (i, 0))],
        out_specs=pl.BlockSpec((rtile, 128), lambda i: (i, 0)),
        compiler_params=pltpu.CompilerParams(dimension_semantics=("parallel",)),
    )(x2)
    return out[:rows].reshape(-1)[:n].reshape(shape)


# ---------------------------------------------------------------------------
# Conv wrappers (im2col / sub-pixel glue around the Pallas matmul)
# ---------------------------------------------------------------------------
# TODO(synk): the im2col / phase patch build is still materialized by XLA (bf16);
# an in-kernel DMA gather (memory_space=pl.ANY + make_async_copy keyed off the K
# grid index) would cut that HBM traffic further.
def _conv_patches(xpad, OH, OW, ksize, stride):
    cols = []
    for di in range(ksize):
        for dj in range(ksize):
            cols.append(xpad[:, di:di + stride * (OH - 1) + 1:stride,
                             dj:dj + stride * (OW - 1) + 1:stride, :])
    return jnp.concatenate(cols, axis=-1)                # (N, OH, OW, k*k*C)


def conv2d_s2(x, w, b, act=None, out_dtype=ACT_DTYPE):
    """x: (N,H,W,Cin) ; w: torch Conv2d layout (Cout,Cin,4,4) ; stride 2, padding 1."""
    N, H, W, Cin = x.shape
    Cout = w.shape[0]
    OH, OW = H // 2, W // 2
    xp = jnp.pad(x.astype(ACT_DTYPE), ((0, 0), (1, 1), (1, 1), (0, 0)))
    p = _conv_patches(xp, OH, OW, 4, 2).reshape(N * OH * OW, 16 * Cin)
    wmat = jnp.transpose(w, (2, 3, 1, 0)).reshape(16 * Cin, Cout)
    out = matmul_bias(p, wmat, b, out_dtype=out_dtype, act=act)
    return out.reshape(N, OH, OW, Cout)


def conv_transpose2d_s2(x, w, b, out_dtype=ACT_DTYPE):
    """x: (N,H,W,Cin) ; w: torch ConvTranspose2d layout (Cin,Cout,4,4) ; s2, p1.

    Sub-pixel (phase) decomposition: output pixel (2m+a, 2n+b) only sees the 2x2
    input window {m+a-1, m+a} x {n+b-1, n+b} and kernel taps (3-a-2p, 3-b-2q).
    -> one matmul with K = 4*Cin, N = 4*Cout over (H+1)*(W+1) window positions.
    """
    N, H, W, Cin = x.shape
    Cout = w.shape[1]
    xp = jnp.pad(x.astype(ACT_DTYPE), ((0, 0), (1, 1), (1, 1), (0, 0)))
    cols = []
    for p_ in range(2):                                  # K ordering = (p, q, ci)
        for q_ in range(2):
            cols.append(xp[:, p_:p_ + H + 1, q_:q_ + W + 1, :])
    a_mat = jnp.concatenate(cols, axis=-1).reshape(N * (H + 1) * (W + 1), 4 * Cin)
    # wmat[(p,q,ci),(a,b,co)] = w[ci,co,3-a-2p,3-b-2q]
    wk = w[:, :, ::-1, ::-1].reshape(Cin, Cout, 2, 2, 2, 2)     # (ci,co,p,a,q,b)
    wmat = jnp.transpose(wk, (2, 4, 0, 3, 5, 1)).reshape(4 * Cin, 4 * Cout)
    bias4 = jnp.tile(b, 4)                                      # (a,b,co), co fastest
    z = matmul_bias(a_mat, wmat, bias4, out_dtype=out_dtype)
    z = z.reshape(N, H + 1, W + 1, 2, 2, Cout)
    # out[:, 2m+a, 2n+b, :] = z[:, m+a, n+b, a, b, :]
    phases = jnp.stack([z[:, 0:H,     0:W,     0, 0, :],
                        z[:, 0:H,     1:W + 1, 0, 1, :],
                        z[:, 1:H + 1, 0:W,     1, 0, :],
                        z[:, 1:H + 1, 1:W + 1, 1, 1, :]], axis=3)   # (N,H,W,4,Cout)
    out = phases.reshape(N, H, W, 2, 2, Cout)
    out = out.transpose(0, 1, 3, 2, 4, 5).reshape(N, 2 * H, 2 * W, Cout)
    return out


# ---------------------------------------------------------------------------
# Generator parameters + forward
# ---------------------------------------------------------------------------
DOWN_CFG = [(3, 64, False), (64, 128, True), (128, 256, True), (256, 512, True),
            (512, 512, True), (512, 512, True), (512, 512, True), (512, 512, True)]
UP_CFG = [(512, 512), (1024, 512), (1024, 512), (1024, 512),
          (1024, 256), (512, 128), (256, 64)]            # up8..up2 (InstanceNorm + ReLU)
# up1: ConvTranspose2d(128, 3) + Tanh (no norm)


def init_params(key):
    params = {"down": [], "up": []}
    k = key
    for cin, cout, _ in DOWN_CFG:
        k, kw, kb = jax.random.split(k, 3)
        params["down"].append({
            "w": 0.02 * jax.random.normal(kw, (cout, cin, 4, 4), jnp.float32),
            "b": 0.02 * jax.random.normal(kb, (cout,), jnp.float32),
            "gamma": jnp.ones((cout,), jnp.float32),
            "beta": jnp.zeros((cout,), jnp.float32),
        })
    for cin, cout in UP_CFG:
        k, kw, kb = jax.random.split(k, 3)
        params["up"].append({
            "w": 0.02 * jax.random.normal(kw, (cin, cout, 4, 4), jnp.float32),
            "b": 0.02 * jax.random.normal(kb, (cout,), jnp.float32),
            "gamma": jnp.ones((cout,), jnp.float32),
            "beta": jnp.zeros((cout,), jnp.float32),
        })
    k, kw, kb = jax.random.split(k, 3)
    params["up1"] = {
        "w": 0.02 * jax.random.normal(kw, (128, 3, 4, 4), jnp.float32),
        "b": 0.02 * jax.random.normal(kb, (3,), jnp.float32),
    }
    return params


def generator_forward(params, x_nchw):
    x = jnp.transpose(x_nchw, (0, 2, 3, 1))              # NCHW -> NHWC

    skips = []
    h = x
    for p, (_, _, norm) in zip(params["down"], DOWN_CFG):
        if norm:
            h = conv2d_s2(h, p["w"], p["b"])
            h = norm_act(h, p["gamma"], p["beta"], act="leaky")
        else:                                            # down1: LeakyReLU fused into matmul
            h = conv2d_s2(h, p["w"], p["b"], act="leaky")
        skips.append(h)                                  # x1 .. x8

    # TODO(synk): nn.Dropout(0.5) in up8/up7/up6 is eval-mode identity here (no RNG).
    h = skips[-1]                                        # x8
    for idx, p in enumerate(params["up"]):               # up8 .. up2
        h = conv_transpose2d_s2(h, p["w"], p["b"])
        h = norm_act(h, p["gamma"], p["beta"], act="relu")
        h = jnp.concatenate([h, skips[-(idx + 2)]], axis=-1)   # skip connection (cat), bf16

    p = params["up1"]                                    # final ConvTranspose + Tanh
    h = conv_transpose2d_s2(h, p["w"], p["b"])           # (N,256,256,3) bf16
    h = tanh_lane_dense(h)                               # f32
    return jnp.transpose(h, (0, 3, 1, 2))                # NHWC -> NCHW


# ---------------------------------------------------------------------------
# Tiny-shape self-checks (conv paths vs XLA convs, norm paths vs jnp reference)
# ---------------------------------------------------------------------------
def _norm_ref(x_f32, gamma, beta, act):
    mean = x_f32.mean(axis=(1, 2), keepdims=True)
    var = x_f32.var(axis=(1, 2), keepdims=True)          # biased, like InstanceNorm2d
    y = (x_f32 - mean) / jnp.sqrt(var + IN_EPS)
    y = y * gamma.reshape(1, 1, 1, -1) + beta.reshape(1, 1, 1, -1)
    return _apply_act(y, act)


def _self_check():
    key = jax.random.PRNGKey(42)
    k1, k2, k3, k4, k5, k6 = jax.random.split(key, 6)
    x = jax.random.normal(k1, (1, 8, 8, 2), jnp.float32)
    xb = x.astype(jnp.bfloat16).astype(jnp.float32)

    wc = 0.1 * jax.random.normal(k2, (3, 2, 4, 4), jnp.float32)   # Conv2d (Cout,Cin,4,4)
    bc = 0.1 * jax.random.normal(k3, (3,), jnp.float32)
    wcb = wc.astype(jnp.bfloat16).astype(jnp.float32)
    got = conv2d_s2(x, wc, bc, out_dtype=jnp.float32)
    ref = jax.lax.conv_general_dilated(
        xb, jnp.transpose(wcb, (2, 3, 1, 0)), window_strides=(2, 2),
        padding=((1, 1), (1, 1)),
        dimension_numbers=("NHWC", "HWIO", "NHWC")) + bc
    assert float(jnp.max(jnp.abs(got - ref))) < 5e-3, "conv2d_s2 mismatch"

    wt = 0.1 * jax.random.normal(k4, (2, 3, 4, 4), jnp.float32)   # ConvT (Cin,Cout,4,4)
    bt = 0.1 * jax.random.normal(k5, (3,), jnp.float32)
    wtb = wt.astype(jnp.bfloat16).astype(jnp.float32)
    got_t = conv_transpose2d_s2(x, wt, bt, out_dtype=jnp.float32)
    ref_t = jax.lax.conv_general_dilated(
        xb, jnp.transpose(wtb[:, :, ::-1, ::-1], (2, 3, 0, 1)),
        window_strides=(1, 1), padding=((2, 2), (2, 2)), lhs_dilation=(2, 2),
        dimension_numbers=("NHWC", "HWIO", "NHWC")) + bt
    assert float(jnp.max(jnp.abs(got_t - ref_t))) < 5e-3, "conv_transpose2d_s2 mismatch"

    # Norm paths: fused (small), two-pass (large), two-pass packed (C=64).
    for shape, act in [((1, 16, 16, 256), "relu"),       # fused single-block path
                       ((1, 64, 64, 128), "relu"),       # HW-tiled two-pass path
                       ((1, 64, 64, 64), "leaky")]:      # lane-packed two-pass path
        k6, ka, kg, kb_ = jax.random.split(k6, 4)
        xn = jax.random.normal(ka, shape, jnp.float32).astype(jnp.bfloat16)
        g = 1.0 + 0.1 * jax.random.normal(kg, (shape[-1],), jnp.float32)
        be = 0.1 * jax.random.normal(kb_, (shape[-1],), jnp.float32)
        got_n = norm_act(xn, g, be, act=act, out_dtype=jnp.float32)
        ref_n = _norm_ref(xn.astype(jnp.float32), g, be, act)
        err = float(jnp.max(jnp.abs(got_n - ref_n)))
        assert err < 1e-2, f"norm_act mismatch {shape}: {err}"


if __name__ == "__main__":
    _self_check()

    key = jax.random.PRNGKey(0)
    pkey, xkey = jax.random.split(key)
    params = init_params(pkey)
    # 8 stride-2 downsamples require spatial >= 256: smallest legal input.
    x = jax.random.normal(xkey, (1, 3, 256, 256), jnp.float32)

    fwd = jax.jit(generator_forward)
    y = jax.block_until_ready(fwd(params, x))

    assert y.shape == (1, 3, 256, 256), y.shape
    assert bool(jnp.all(jnp.isfinite(y)))
    assert bool(jnp.all(jnp.abs(y) <= 1.0 + 1e-6))       # tanh output range
    print("KERNEL_OK")
</pallas_src>

<mosaic_0001>
module attributes {stable_mosaic.version = 11 : i64} {
  func.func @_matmul_bias_act_1k_kernel(%arg0: i32, %arg1: i32, %arg2: memref<16x64xbf16, #tpu.memory_space<vmem>>, %arg3: memref<64x128xbf16, #tpu.memory_space<vmem>>, %arg4: memref<1x128xf32, #tpu.memory_space<vmem>>, %arg5: memref<16x128xf32, #tpu.memory_space<vmem>>) attributes {dimension_semantics = [#tpu.dimension_semantics<parallel>, #tpu.dimension_semantics<parallel>], iteration_bounds = array<i64: 1, 1>, scalar_prefetch = 0 : i64, scratch_operands = 0 : i64, tpu.core_type = #tpu.core_type<tc>, window_params = [{transform_indices = @transform_0, window_bounds = array<i64: 16, 64>}, {transform_indices = @transform_1, window_bounds = array<i64: 64, 128>}, {transform_indices = @transform_2, window_bounds = array<i64: 1, 128>}, {transform_indices = @transform_3, window_bounds = array<i64: 16, 128>}]} {
    %c0 = arith.constant 0 : index
    %c0_0 = arith.constant 0 : index
    %0 = vector.load %arg2[%c0, %c0_0] : memref<16x64xbf16, #tpu.memory_space<vmem>>, vector<16x64xbf16>
    %c0_1 = arith.constant 0 : index
    %c0_2 = arith.constant 0 : index
    %1 = vector.load %arg3[%c0_1, %c0_2] : memref<64x128xbf16, #tpu.memory_space<vmem>>, vector<64x128xbf16>
    %cst = arith.constant dense<0.000000e+00> : vector<16x128xf32>
    %2 = tpu.matmul %0, %1, %cst {dimension_numbers = #tpu.dot_dimension_numbers<[1], [0], [0], [1], [0, 0, 1, 1], [], []>} : vector<16x64xbf16>, vector<64x128xbf16>, vector<16x128xf32> -> vector<16x128xf32>
    %c0_3 = arith.constant 0 : index
    %c0_4 = arith.constant 0 : index
    %3 = vector.load %arg4[%c0_3, %c0_4] : memref<1x128xf32, #tpu.memory_space<vmem>>, vector<1x128xf32>
    %4 = vector.broadcast %3 : vector<1x128xf32> to vector<16x128xf32>
    %5 = arith.addf %2, %4 : vector<16x128xf32>
    %c0_5 = arith.constant 0 : index
    %c0_6 = arith.constant 0 : index
    %6 = vector.load %arg5[%c0_5, %c0_6] : memref<16x128xf32, #tpu.memory_space<vmem>>, vector<16x128xf32>
    tpu.vector_store %arg5[%c0_5, %c0_6], %5 {strides = array<i32>} : memref<16x128xf32, #tpu.memory_space<vmem>>, vector<16x128xf32>,
    return
  }
  func.func @transform_0(%arg0: i32, %arg1: i32) -> (i32, i32) {
    %c0_i32 = arith.constant 0 : i32
    %c0_i32_0 = arith.constant 0 : i32
    return %arg0, %c0_i32 : i32, i32
  }
  func.func @transform_1(%arg0: i32, %arg1: i32) -> (i32, i32) {
    %c0_i32 = arith.constant 0 : i32
    %c0_i32_0 = arith.constant 0 : i32
    return %c0_i32, %arg1 : i32, i32
  }
  func.func @transform_2(%arg0: i32, %arg1: i32) -> (i32, i32) {
    %c0_i32 = arith.constant 0 : i32
    %c0_i32_0 = arith.constant 0 : i32
    return %c0_i32, %arg1 : i32, i32
  }
  func.func @transform_3(%arg0: i32, %arg1: i32) -> (i32, i32) {
    %c0_i32 = arith.constant 0 : i32
    return %arg0, %arg1 : i32, i32
  }
}

</mosaic_0001>

<llo_original>
// kernel: tpu_custom_call.1
$region0: #{tpu_custom_call.1}
  #allocation0 [shape = 'u32[]', space=smem, size = 0x4, offset = 0x4, fixed_abs, tag = 'smem constant byte address 0x4 - core index']
  #allocation1 [shape = 'u32[72,128]{1,0:T(1,128)}', space=vmem, size = 0x9000, scoped, tag = 'internal scratch']
  %s0 = inlined_call_operand.hbm [shape: bf16[16,64], index: 0, kind: input, shape index: {}]
  %s1 = inlined_call_operand.hbm [shape: bf16[64,128], index: 1, kind: input, shape index: {}]
  %s2 = inlined_call_operand.vmem [shape: f32[1,128], index: 2, kind: input, shape index: {}]
  %s3 = inlined_call_operand.hbm [shape: f32[16,128], index: 3, kind: output, shape index: {}]
  %s4 = sld [smem:[#allocation0]]
  $region30: #{tpu_custom_call.1} parent=0
    _
  %s6 = ssub.s32 1, %s4
  %s7 = scalar_select 0, %s6, %s4
  $region1: #{tpu_custom_call.1} parent=0
    #allocation2 [shape = 'u8[4096]{0}', space=vmem, size = 0x1000, scoped, tag = 'input window, operand 0, single buffered']
    #allocation3 [shape = 's32[1]{0}', space=sflag, size = 0x4, scoped, tag = 'scoped memory for tpu_custom_call.1']
    #allocation4 [shape = 's32[1]{0}', space=sflag, size = 0x4, scoped, tag = 'scoped memory for tpu_custom_call.1']
    #allocation5 [shape = 'u8[16384]{0}', space=vmem, size = 0x4000, scoped, tag = 'input window, operand 1, single buffered']
    #allocation6 [shape = 's32[1]{0}', space=sflag, size = 0x4, scoped, tag = 'scoped memory for tpu_custom_call.1']
    #allocation7 [shape = 'u8[8192]{0}', space=vmem, size = 0x2000, scoped, tag = 'output window, operand 0, single buffered']
    %8 = vsyncpa [#allocation3], 0
    %9 = vsyncpa [#allocation6], 0
    %10 = vsyncpa [#allocation4], 0
    // Predicated region
    $region2: #{tpu_custom_call.1} parent=1 // pred_check
      _
    $region3: #{tpu_custom_call.1} parent=1 // pred_check_branch
      %12 = sbr.rel (0) target = $region5
    $region4: #{tpu_custom_call.1} parent=1 // pred_region
      %14 = vsyncadd [#allocation3], 0
      %s15 = sshll.u32 %s0, 4
      %s16 = int_to_ptr.hbm [resolvable:$true] %s15
      %s17 = sshll.u32 [#allocation2], 4
      %s18 = int_to_ptr.vmem [resolvable:$true] %s17
      %23 = dma.hbm_to_vmem [thread:$0]  %s16, 128, %s18, [#allocation3], 64, 64, 4
    $region5: #{tpu_custom_call.1} parent=1 // pred_fallthru
      _
    // Predicated region
    $region6: #{tpu_custom_call.1} parent=1 // pred_check
      _
    $region7: #{tpu_custom_call.1} parent=1 // pred_check_branch
      %25 = sbr.rel (0) target = $region9
    $region8: #{tpu_custom_call.1} parent=1 // pred_region
      %27 = vsyncadd [#allocation6], 0
      %s28 = sshll.u32 %s1, 4
      %s29 = int_to_ptr.hbm [resolvable:$true] %s28
      %s30 = sshll.u32 [#allocation5], 4
      %s31 = int_to_ptr.vmem [resolvable:$true] %s30
      %36 = dma.hbm_to_vmem [thread:$0]  %s29, 512, %s31, [#allocation6], 64, 64, 4
    $region9: #{tpu_custom_call.1} parent=1 // pred_fallthru
      _
    // Predicated region
    $region10: #{tpu_custom_call.1} parent=1 // pred_check
      _
    $region11: #{tpu_custom_call.1} parent=1 // pred_check_branch
      %38 = sbr.rel (0) target = $region13
    $region12: #{tpu_custom_call.1} parent=1 // pred_region
      _
    $region13: #{tpu_custom_call.1} parent=1 // pred_fallthru
      _
    // Predicated region
    $region14: #{tpu_custom_call.1} parent=1 // pred_check
      _
    $region15: #{tpu_custom_call.1} parent=1 // pred_check_branch
      %40 = sbr.rel (0) target = $region17
    $region16: #{tpu_custom_call.1} parent=1 // pred_region
      %42 = dma.done [#allocation3], 128
    $region17: #{tpu_custom_call.1} parent=1 // pred_fallthru
      _
    // Predicated region
    $region18: #{tpu_custom_call.1} parent=1 // pred_check
      _
    $region19: #{tpu_custom_call.1} parent=1 // pred_check_branch
      %44 = sbr.rel (0) target = $region21
    $region20: #{tpu_custom_call.1} parent=1 // pred_region
      %46 = dma.done [#allocation6], 512
    $region21: #{tpu_custom_call.1} parent=1 // pred_fallthru
      _
    %v48 = vld [vmem:[#allocation2] sm:$0xf]
    %v49 = vld [vmem:[#allocation2 + $0x4] sm:$0xf]
    %v50 = vld [vmem:[#allocation5] sm:$0xf]
    %v51 = vld [vmem:[#allocation5 + $0x4] sm:$0xf]
    %v52 = vld [vmem:[#allocation5 + $0x8] sm:$0xf]
    %v53 = vld [vmem:[#allocation5 + $0xc] sm:$0xf]
    %v54 = vld [vmem:[#allocation5 + $0x10] sm:$0xf]
    %v55 = vld [vmem:[#allocation5 + $0x14] sm:$0xf]
    %v56 = vld [vmem:[#allocation5 + $0x18] sm:$0xf]
    %v57 = vld [vmem:[#allocation5 + $0x1c] sm:$0xf]
    %v58 = vld [vmem:[%s2] sm:$0x1]
    %v60 = vperm.slane %v58, 0
    %v64 = vunpack.c.l.b16 %v48
    %v65 = vunpack.c.l.b16 %v49
    %v66 = vpack.c.b16 %v65, %v64
    %v75 = vunpack.c.l.b16 %v50
    %v76 = vunpack.c.l.b16 %v51
    %v77 = vunpack.c.l.b16 %v52
    %v78 = vunpack.c.l.b16 %v53
    %v79 = vunpack.c.l.b16 %v54
    %v80 = vunpack.c.l.b16 %v55
    %v81 = vunpack.c.l.b16 %v56
    %v82 = vunpack.c.l.b16 %v57
    %v83 = vpack.c.b16 %v76, %v75
    %v84 = vpack.c.b16 %v78, %v77
    %v85 = vpack.c.b16 %v80, %v79
    %v86 = vpack.c.b16 %v82, %v81
    %vm91 = vcmask 523264
    %v93 = vsel %vm91, %v66, 0
    %95 = vmatpush.bf16.msra.mxu0 0
    %96 = vmatpush.bf16.msra.mxu0 0
    %97 = vmatpush.bf16.msra.mxu0 0
    %98 = vmatpush.bf16.msra.mxu0 0
    %99 = vmatpush.bf16.msra.mxu0 %v86
    %100 = vmatpush.bf16.msra.mxu0 %v85
    %101 = vmatpush.bf16.msra.mxu0 %v84
    %102 = vmatpush.bf16.msra.mxu0 %v83
    %103 = vmatmul.bf16.gmra.mxu0 %v93
    %v104 = vpop.f32.mrf.mxu0
    %v105 = vadd.f32 %v60, %v104
    %v106 = vpop.f32.mrf.mxu0
    %v107 = vadd.f32 %v60, %v106
    %108 = vdwg.mxu0
    %109 = vst [vmem:[#allocation7] sm:$0xff] %v105
    %110 = vst [vmem:[#allocation7 + $0x8] sm:$0xff] %v107
    // Predicated region
    $region22: #{tpu_custom_call.1} parent=1 // pred_check
      _
    $region23: #{tpu_custom_call.1} parent=1 // pred_check_branch
      %112 = sbr.rel (0) target = $region25
    $region24: #{tpu_custom_call.1} parent=1 // pred_region
      %114 = vsyncadd [#allocation4], 0
      %s115 = sshll.u32 [#allocation7], 4
      %s116 = int_to_ptr.vmem [resolvable:$true] %s115
      %s117 = sshll.u32 %s3, 4
      %s118 = int_to_ptr.hbm [resolvable:$true] %s117
      %123 = dma.vmem_to_hbm [thread:$0]  %s116, 256, %s118, [#allocation4], 128, 128, 8
    $region25: #{tpu_custom_call.1} parent=1 // pred_fallthru
      _
    // Predicated region
    $region26: #{tpu_custom_call.1} parent=1 // pred_check
      _
    $region27: #{tpu_custom_call.1} parent=1 // pred_check_branch
      %125 = sbr.rel (0) target = $region29
    $region28: #{tpu_custom_call.1} parent=1 // pred_region
      %127 = dma.done [#allocation4], 256
    $region29: #{tpu_custom_call.1} parent=1 // pred_fallthru
      _
    %128 = vsyncpa [#allocation3], 1
    %129 = vsyncpa [#allocation6], 1
    %130 = vsyncpa [#allocation4], 1

</llo_original>
